<compile_context>
chip_gen: v6e
topology: v6e:2x2x1
jax: 0.10.0
libtpu: 0.0.40
codegen_flags: <defaults>
</compile_context>

<pallas_src>
import jax
import jax.numpy as jnp
from jax.experimental import pallas as pl
from jax.experimental.pallas import tpu as pltpu


# --------------------------------------------------------------------------- #
# Kernel: one (Bblk*H, .) slab of images per grid step, everything lane-dense.
# --------------------------------------------------------------------------- #
def _make_basic_block_kernel(H, Mblk, WCin, WCout, has_projection):
    def kernel(*refs):
        if has_projection:
            (xc_ref, w1_ref, s1_ref, b1_ref, w2_ref, s2_ref, b2_ref,
             ws_ref, ss_ref, bs_ref, out_ref) = refs
        else:
            (xc_ref, w1_ref, s1_ref, b1_ref, w2_ref, s2_ref, b2_ref,
             out_ref) = refs

        xc = xc_ref[...]                                   # (Mblk, 3*WCin) bf16

        # ---- conv1 + bn1 + relu: ONE MXU matmul, K = 3*W*Cin ---- #
        acc1 = jnp.dot(xc, w1_ref[...], preferred_element_type=jnp.float32)
        h1 = jnp.maximum(acc1 * s1_ref[...] + b1_ref[...], 0.0)
        h1b = h1.astype(jnp.bfloat16)

        # ---- conv2: 3 matmuls on the UNSHIFTED h1; vertical taps are f32 row
        # shifts of the results, per-image boundary rows zeroed. ---- #
        p_up = jnp.dot(h1b, w2_ref[0], preferred_element_type=jnp.float32)   # wants row h-1
        p_mid = jnp.dot(h1b, w2_ref[1], preferred_element_type=jnp.float32)
        p_dn = jnp.dot(h1b, w2_ref[2], preferred_element_type=jnp.float32)   # wants row h+1

        zrow = jnp.zeros((1, WCout), jnp.float32)
        t_up = jnp.concatenate([zrow, p_up[:Mblk - 1]], axis=0)   # t_up[h] = p_up[h-1]
        t_dn = jnp.concatenate([p_dn[1:], zrow], axis=0)          # t_dn[h] = p_dn[h+1]

        row = jax.lax.broadcasted_iota(jnp.int32, (Mblk, WCout), 0) % H
        t_up = jnp.where(row == 0, 0.0, t_up)          # zero pad above each image
        t_dn = jnp.where(row == H - 1, 0.0, t_dn)      # zero pad below each image

        o2 = (p_mid + t_up + t_dn) * s2_ref[...] + b2_ref[...]

        # ---- shortcut: center tap of the im2col sits at lane offset 0 ---- #
        xs = xc[:, :WCin]
        if has_projection:
            sc = jnp.dot(xs, ws_ref[...], preferred_element_type=jnp.float32)
            sc = sc * ss_ref[...] + bs_ref[...]
        else:
            sc = xs.astype(jnp.float32)                # WCin == WCout here

        out_ref[...] = jnp.maximum(o2 + sc, 0.0)       # relu(out + shortcut)

    return kernel


# --------------------------------------------------------------------------- #
# One-time weight preparation (outside the jitted forward).
# --------------------------------------------------------------------------- #
def _fold_bn(gamma, beta, mean, var, W, eps=1e-5):
    scale = (gamma / jnp.sqrt(var + eps)).astype(jnp.float32)
    bias = (beta - mean * scale).astype(jnp.float32)
    # Lane index is w*C + c, so tile the per-channel params across W.
    return jnp.tile(scale, W).reshape(1, -1), jnp.tile(bias, W).reshape(1, -1)


def _toeplitz_conv3x3(w, Wsp):
    """PyTorch (Cout, Cin, 3, 3) -> (3, Wsp*Cin, Wsp*Cout) f32, one mat per
    vertical tap kh.  mats[kh][(w_in*Cin+ci), (w_out*Cout+co)] = w[co,ci,kh,kw]
    for w_in = w_out + kw - 1 (zero elsewhere): horizontal taps + W padding are
    a banded block-Toeplitz matmul."""
    wt = jnp.transpose(w, (2, 3, 1, 0)).astype(jnp.float32)  # (kh, kw, Cin, Cout)
    mats = []
    for kh in range(3):
        m = jnp.zeros((Wsp * w.shape[1], Wsp * w.shape[0]), jnp.float32)
        for kw in range(3):
            band = jnp.eye(Wsp, Wsp, 1 - kw, dtype=jnp.float32)
            m = m + jnp.kron(band, wt[kh, kw])
        mats.append(m)
    return jnp.stack(mats)


def prepare_basic_block_params(params, W, stride=1):
    """Build Toeplitz / kron / folded-BN constants once per weight set."""
    Cout, Cin = params["w1"].shape[:2]
    WCin, WCout = W * Cin, W * Cout
    has_projection = (stride != 1) or (Cin != Cout)

    # Dense-Toeplitz VMEM guard (v7x: 64 MiB physical, 32 MiB default scoped).
    weight_bytes = 2 * (3 * WCin * WCout + 3 * WCout * WCout + WCin * WCout)
    assert weight_bytes < 8 * 1024 * 1024, (
        "dense W-Toeplitz weights too large to keep VMEM-resident; block the "
        "banded Toeplitz along W or fall back to per-tap (Cin,Cout) matmuls")
    # TODO(synk): block the banded Toeplitz along W (only 3 W-blocks feed each
    # output W-block) once W*C grows to real ResNet sizes.

    t1 = _toeplitz_conv3x3(params["w1"], W)
    # K-stacked conv1 weight, matching im2col order [row h, row h-1, row h+1].
    w1 = jnp.concatenate([t1[1], t1[0], t1[2]], axis=0).astype(jnp.bfloat16)
    s1, b1 = _fold_bn(params["g1"], params["b1"], params["m1"], params["v1"], W)
    w2 = _toeplitz_conv3x3(params["w2"], W).astype(jnp.bfloat16)
    s2, b2 = _fold_bn(params["g2"], params["b2"], params["m2"], params["v2"], W)

    prep = {"w1": w1, "s1": s1, "b1": b1, "w2": w2, "s2": s2, "b2": b2}
    if has_projection:
        wsc = jnp.transpose(params["wsc"][:, :, 0, 0], (1, 0)).astype(jnp.float32)
        prep["ws"] = jnp.kron(jnp.eye(W, dtype=jnp.float32), wsc).astype(jnp.bfloat16)
        prep["ss"], prep["bs"] = _fold_bn(
            params["gsc"], params["bsc"], params["msc"], params["vsc"], W)
    return prep


# --------------------------------------------------------------------------- #
# Forward wrapper: NCHW in / NCHW out.
# --------------------------------------------------------------------------- #
def _pick_batch_block(B, H, target_m=256):
    """Largest divisor of B with Bblk*H <= target_m; keep >= 2 grid steps
    (v7x megacore) when that does not drop M below 128."""
    cands = [d for d in range(1, B + 1) if B % d == 0 and d * H <= target_m]
    if not cands:
        return 1
    bblk = max(cands)
    if B // bblk < 2:
        alt = [d for d in cands if B // d >= 2 and d * H >= 128]
        if alt:
            bblk = max(alt)
    return bblk


def basic_block_forward(x_nchw, prep, stride=1):
    # TODO(synk): stride > 1 (spatial downsampling) not implemented in this kernel.
    assert stride == 1, "only stride=1 supported by this Pallas kernel"

    B, Cin, H, W = x_nchw.shape
    WCin = W * Cin
    WCout = prep["w1"].shape[1]
    has_projection = "ws" in prep
    assert H % 8 == 0, "H must be a multiple of 8 for the (8,128) store tiling"

    # NCHW -> lane-dense (B, H, W*Cin) rows, shipped in bf16 (halves DMA bytes).
    x = jnp.transpose(x_nchw, (0, 2, 3, 1)).reshape(B, H, WCin).astype(jnp.bfloat16)
    # Vertical im2col for conv1 (K = 3*W*Cin): [row h, row h-1, row h+1] with
    # zero rows at the image top/bottom.  Center tap first so the in-kernel
    # shortcut slice starts at lane 0.
    zrow = jnp.zeros((B, 1, WCin), jnp.bfloat16)
    x_up = jnp.concatenate([zrow, x[:, :-1]], axis=1)      # row h-1
    x_dn = jnp.concatenate([x[:, 1:], zrow], axis=1)       # row h+1
    x_col = jnp.concatenate([x, x_up, x_dn], axis=-1).reshape(B * H, 3 * WCin)

    bblk = _pick_batch_block(B, H)
    Mblk = bblk * H
    grid = (B // bblk,)

    inputs = [x_col, prep["w1"], prep["s1"], prep["b1"],
              prep["w2"], prep["s2"], prep["b2"]]
    in_specs = [
        pl.BlockSpec((Mblk, 3 * WCin), lambda b: (b, 0)),        # activations
        pl.BlockSpec((3 * WCin, WCout), lambda b: (0, 0)),       # w1 (resident)
        pl.BlockSpec((1, WCout), lambda b: (0, 0)),              # s1
        pl.BlockSpec((1, WCout), lambda b: (0, 0)),              # b1
        pl.BlockSpec((3, WCout, WCout), lambda b: (0, 0, 0)),    # w2 (resident)
        pl.BlockSpec((1, WCout), lambda b: (0, 0)),              # s2
        pl.BlockSpec((1, WCout), lambda b: (0, 0)),              # b2
    ]
    if has_projection:
        inputs += [prep["ws"], prep["ss"], prep["bs"]]
        in_specs += [
            pl.BlockSpec((WCin, WCout), lambda b: (0, 0)),
            pl.BlockSpec((1, WCout), lambda b: (0, 0)),
            pl.BlockSpec((1, WCout), lambda b: (0, 0)),
        ]

    kernel = _make_basic_block_kernel(H, Mblk, WCin, WCout, has_projection)

    out_flat = pl.pallas_call(
        kernel,
        out_shape=jax.ShapeDtypeStruct((B * H, WCout), jnp.float32),
        grid=grid,
        in_specs=in_specs,
        out_specs=pl.BlockSpec((Mblk, WCout), lambda b: (b, 0)),  # lane-dense
        compiler_params=pltpu.CompilerParams(
            dimension_semantics=("parallel",),                    # megacore on v7x
        ),
    )(*inputs)

    out = out_flat.reshape(B, H, W, WCout // W)
    return jnp.transpose(out, (0, 3, 1, 2))                       # NHWC -> NCHW


# --------------------------------------------------------------------------- #
# Pure-JAX reference (mirrors the PyTorch forward, BN in eval mode, f32).
# --------------------------------------------------------------------------- #
def reference_forward(x, p, stride=1):
    def conv(x, w, stride, pad):
        return jax.lax.conv_general_dilated(
            x, w, (stride, stride), ((pad, pad), (pad, pad)),
            dimension_numbers=("NCHW", "OIHW", "NCHW"))

    def bn(x, g, b, m, v, eps=1e-5):
        g, b, m, v = (a[None, :, None, None] for a in (g, b, m, v))
        return (x - m) / jnp.sqrt(v + eps) * g + b

    out = jax.nn.relu(bn(conv(x, p["w1"], stride, 1), p["g1"], p["b1"], p["m1"], p["v1"]))
    out = bn(conv(out, p["w2"], 1, 1), p["g2"], p["b2"], p["m2"], p["v2"])
    if stride != 1 or x.shape[1] != p["w1"].shape[0]:
        sc = bn(conv(x, p["wsc"], stride, 0), p["gsc"], p["bsc"], p["msc"], p["vsc"])
    else:
        sc = x
    return jax.nn.relu(out + sc)


# --------------------------------------------------------------------------- #
def _init_params(key, in_planes, planes):
    ks = jax.random.split(key, 6)

    def bn_init(k, c):
        k1, k2, k3, k4 = jax.random.split(k, 4)
        gamma = jax.random.uniform(k1, (c,), jnp.float32, 0.5, 1.5)
        beta = 0.1 * jax.random.normal(k2, (c,), jnp.float32)
        mean = 0.1 * jax.random.normal(k3, (c,), jnp.float32)
        var = jax.random.uniform(k4, (c,), jnp.float32, 0.5, 1.5)
        return gamma, beta, mean, var

    p = {}
    p["w1"] = 0.1 * jax.random.normal(ks[0], (planes, in_planes, 3, 3), jnp.float32)
    p["g1"], p["b1"], p["m1"], p["v1"] = bn_init(ks[1], planes)
    p["w2"] = 0.1 * jax.random.normal(ks[2], (planes, planes, 3, 3), jnp.float32)
    p["g2"], p["b2"], p["m2"], p["v2"] = bn_init(ks[3], planes)
    p["wsc"] = 0.1 * jax.random.normal(ks[4], (planes, in_planes, 1, 1), jnp.float32)
    p["gsc"], p["bsc"], p["msc"], p["vsc"] = bn_init(ks[5], planes)
    return p


if __name__ == "__main__":
    key = jax.random.PRNGKey(0)
    kx1, kp1, kx2, kp2 = jax.random.split(key, 4)

    run = jax.jit(basic_block_forward)

    # bf16 MXU operands (and bf16-shipped activations) vs. an f32 reference:
    # rounding stays ~1e-2; a real indexing bug would show O(1) errors.
    TOL = dict(atol=4e-2, rtol=4e-2)

    # Case 1: projection shortcut (in_planes != planes).
    B, in_planes, planes, H, W = 2, 4, 8, 16, 16
    x1 = jax.random.normal(kx1, (B, in_planes, H, W), jnp.float32)
    p1 = _init_params(kp1, in_planes, planes)
    prep1 = prepare_basic_block_params(p1, W)          # one-time weight prep
    out1 = jax.block_until_ready(run(x1, prep1))
    ref1 = reference_forward(x1, p1, stride=1)
    assert out1.shape == (B, planes, H, W), out1.shape
    assert jnp.allclose(out1, ref1, **TOL), float(jnp.max(jnp.abs(out1 - ref1)))

    # Case 2: identity shortcut (in_planes == planes) -> no projection matmul.
    x2 = jax.random.normal(kx2, (B, planes, H, W), jnp.float32)
    p2 = _init_params(kp2, planes, planes)
    prep2 = prepare_basic_block_params(p2, W)
    out2 = jax.block_until_ready(run(x2, prep2))
    ref2 = reference_forward(x2, p2, stride=1)
    assert out2.shape == (B, planes, H, W), out2.shape
    assert jnp.allclose(out2, ref2, **TOL), float(jnp.max(jnp.abs(out2 - ref2)))

    print("KERNEL_OK")
</pallas_src>

<mosaic_0001>
module attributes {stable_mosaic.version = 11 : i64} {
  func.func @kernel(%arg0: i32, %arg1: memref<32x192xbf16, #tpu.memory_space<vmem>>, %arg2: memref<192x128xbf16, #tpu.memory_space<vmem>>, %arg3: memref<1x128xf32, #tpu.memory_space<vmem>>, %arg4: memref<1x128xf32, #tpu.memory_space<vmem>>, %arg5: memref<3x128x128xbf16, #tpu.memory_space<vmem>>, %arg6: memref<1x128xf32, #tpu.memory_space<vmem>>, %arg7: memref<1x128xf32, #tpu.memory_space<vmem>>, %arg8: memref<64x128xbf16, #tpu.memory_space<vmem>>, %arg9: memref<1x128xf32, #tpu.memory_space<vmem>>, %arg10: memref<1x128xf32, #tpu.memory_space<vmem>>, %arg11: memref<32x128xf32, #tpu.memory_space<vmem>>) attributes {dimension_semantics = [#tpu.dimension_semantics<parallel>], iteration_bounds = array<i64: 1>, scalar_prefetch = 0 : i64, scratch_operands = 0 : i64, tpu.core_type = #tpu.core_type<tc>, window_params = [{transform_indices = @transform_0, window_bounds = array<i64: 32, 192>}, {pipeline_mode = #tpu.pipeline_mode<synchronous>, transform_indices = @transform_1, window_bounds = array<i64: 192, 128>}, {pipeline_mode = #tpu.pipeline_mode<synchronous>, transform_indices = @transform_2, window_bounds = array<i64: 1, 128>}, {pipeline_mode = #tpu.pipeline_mode<synchronous>, transform_indices = @transform_3, window_bounds = array<i64: 1, 128>}, {pipeline_mode = #tpu.pipeline_mode<synchronous>, transform_indices = @transform_4, window_bounds = array<i64: 3, 128, 128>}, {pipeline_mode = #tpu.pipeline_mode<synchronous>, transform_indices = @transform_5, window_bounds = array<i64: 1, 128>}, {pipeline_mode = #tpu.pipeline_mode<synchronous>, transform_indices = @transform_6, window_bounds = array<i64: 1, 128>}, {pipeline_mode = #tpu.pipeline_mode<synchronous>, transform_indices = @transform_7, window_bounds = array<i64: 64, 128>}, {pipeline_mode = #tpu.pipeline_mode<synchronous>, transform_indices = @transform_8, window_bounds = array<i64: 1, 128>}, {pipeline_mode = #tpu.pipeline_mode<synchronous>, transform_indices = @transform_9, window_bounds = array<i64: 1, 128>}, {transform_indices = @transform_10, window_bounds = array<i64: 32, 128>}]} {
    %c0 = arith.constant 0 : index
    %c0_0 = arith.constant 0 : index
    %0 = vector.load %arg1[%c0, %c0_0] : memref<32x192xbf16, #tpu.memory_space<vmem>>, vector<32x192xbf16>
    %c0_1 = arith.constant 0 : index
    %c0_2 = arith.constant 0 : index
    %1 = vector.load %arg2[%c0_1, %c0_2] : memref<192x128xbf16, #tpu.memory_space<vmem>>, vector<192x128xbf16>
    %cst = arith.constant dense<0.000000e+00> : vector<32x128xf32>
    %2 = tpu.matmul %0, %1, %cst {dimension_numbers = #tpu.dot_dimension_numbers<[1], [0], [0], [1], [0, 0, 1, 1], [], []>} : vector<32x192xbf16>, vector<192x128xbf16>, vector<32x128xf32> -> vector<32x128xf32>
    %c0_3 = arith.constant 0 : index
    %c0_4 = arith.constant 0 : index
    %3 = vector.load %arg3[%c0_3, %c0_4] : memref<1x128xf32, #tpu.memory_space<vmem>>, vector<1x128xf32>
    %4 = vector.broadcast %3 : vector<1x128xf32> to vector<32x128xf32>
    %5 = arith.mulf %2, %4 : vector<32x128xf32>
    %c0_5 = arith.constant 0 : index
    %c0_6 = arith.constant 0 : index
    %6 = vector.load %arg4[%c0_5, %c0_6] : memref<1x128xf32, #tpu.memory_space<vmem>>, vector<1x128xf32>
    %7 = vector.broadcast %6 : vector<1x128xf32> to vector<32x128xf32>
    %8 = arith.addf %5, %7 : vector<32x128xf32>
    %cst_7 = arith.constant 0.000000e+00 : f32
    %9 = vector.broadcast %cst_7 : f32 to vector<32x128xf32>
    %10 = arith.maximumf %8, %9 : vector<32x128xf32>
    %11 = arith.truncf %10 : vector<32x128xf32> to vector<32x128xbf16>
    %c0_8 = arith.constant 0 : index
    %c0_9 = arith.constant 0 : index
    %c0_10 = arith.constant 0 : index
    %12 = vector.load %arg5[%c0_8, %c0_9, %c0_10] : memref<3x128x128xbf16, #tpu.memory_space<vmem>>, vector<1x128x128xbf16>
    %13 = vector.shape_cast %12 : vector<1x128x128xbf16> to vector<128x128xbf16>
    %cst_11 = arith.constant dense<0.000000e+00> : vector<32x128xf32>
    %14 = tpu.matmul %11, %13, %cst_11 {dimension_numbers = #tpu.dot_dimension_numbers<[1], [0], [0], [1], [0, 0, 1, 1], [], []>} : vector<32x128xbf16>, vector<128x128xbf16>, vector<32x128xf32> -> vector<32x128xf32>
    %c1 = arith.constant 1 : index
    %c0_12 = arith.constant 0 : index
    %c0_13 = arith.constant 0 : index
    %15 = vector.load %arg5[%c1, %c0_12, %c0_13] : memref<3x128x128xbf16, #tpu.memory_space<vmem>>, vector<1x128x128xbf16>
    %16 = vector.shape_cast %15 : vector<1x128x128xbf16> to vector<128x128xbf16>
    %cst_14 = arith.constant dense<0.000000e+00> : vector<32x128xf32>
    %17 = tpu.matmul %11, %16, %cst_14 {dimension_numbers = #tpu.dot_dimension_numbers<[1], [0], [0], [1], [0, 0, 1, 1], [], []>} : vector<32x128xbf16>, vector<128x128xbf16>, vector<32x128xf32> -> vector<32x128xf32>
    %c2 = arith.constant 2 : index
    %c0_15 = arith.constant 0 : index
    %c0_16 = arith.constant 0 : index
    %18 = vector.load %arg5[%c2, %c0_15, %c0_16] : memref<3x128x128xbf16, #tpu.memory_space<vmem>>, vector<1x128x128xbf16>
    %19 = vector.shape_cast %18 : vector<1x128x128xbf16> to vector<128x128xbf16>
    %cst_17 = arith.constant dense<0.000000e+00> : vector<32x128xf32>
    %20 = tpu.matmul %11, %19, %cst_17 {dimension_numbers = #tpu.dot_dimension_numbers<[1], [0], [0], [1], [0, 0, 1, 1], [], []>} : vector<32x128xbf16>, vector<128x128xbf16>, vector<32x128xf32> -> vector<32x128xf32>
    %cst_18 = arith.constant 0.000000e+00 : f32
    %21 = vector.broadcast %cst_18 : f32 to vector<1x128xf32>
    %22 = vector.extract_strided_slice %14 {offsets = [0, 0], sizes = [31, 128], strides = [1, 1]} : vector<32x128xf32> to vector<31x128xf32>
    %23 = tpu.concatenate %21, %22 in 0 : vector<1x128xf32>, vector<31x128xf32> -> vector<32x128xf32>
    %24 = vector.extract_strided_slice %20 {offsets = [1, 0], sizes = [31, 128], strides = [1, 1]} : vector<32x128xf32> to vector<31x128xf32>
    %25 = tpu.concatenate %24, %21 in 0 : vector<31x128xf32>, vector<1x128xf32> -> vector<32x128xf32>
    %26 = tpu.iota {dimensions = array<i32: 0>} : vector<32x128xi32>
    %c16_i32 = arith.constant 16 : i32
    %c0_i32 = arith.constant 0 : i32
    %27 = arith.cmpi eq, %c16_i32, %c0_i32 : i32
    %c1_i32 = arith.constant 1 : i32
    %28 = arith.select %27, %c1_i32, %c16_i32 : i32
    %29 = vector.broadcast %28 : i32 to vector<32x128xi32>
    %30 = arith.remsi %26, %29 : vector<32x128xi32>
    %c0_i32_19 = arith.constant 0 : i32
    %31 = vector.broadcast %c0_i32_19 : i32 to vector<32x128xi32>
    %32 = arith.cmpi ne, %30, %31 : vector<32x128xi32>
    %c0_i32_20 = arith.constant 0 : i32
    %33 = vector.broadcast %c0_i32_20 : i32 to vector<32x128xi32>
    %34 = arith.cmpi slt, %30, %33 : vector<32x128xi32>
    %c0_i32_21 = arith.constant 0 : i32
    %35 = arith.cmpi slt, %28, %c0_i32_21 : i32
    %36 = vector.broadcast %35 : i1 to vector<32x128xi1>
    %37 = vector.broadcast %36 : vector<32x128xi1> to vector<32x128xi1>
    %38 = arith.xori %34, %37 : vector<32x128xi1>
    %39 = arith.andi %38, %32 : vector<32x128xi1>
    %40 = vector.broadcast %28 : i32 to vector<32x128xi32>
    %41 = arith.addi %30, %40 : vector<32x128xi32>
    %42 = arith.select %39, %41, %30 : vector<32x128xi1>, vector<32x128xi32>
    %c0_i32_22 = arith.constant 0 : i32
    %43 = vector.broadcast %c0_i32_22 : i32 to vector<32x128xi32>
    %44 = arith.cmpi eq, %42, %43 : vector<32x128xi32>
    %cst_23 = arith.constant 0.000000e+00 : f32
    %45 = vector.broadcast %cst_23 : f32 to vector<32x128xf32>
    %46 = arith.select %44, %45, %23 : vector<32x128xi1>, vector<32x128xf32>
    %c15_i32 = arith.constant 15 : i32
    %47 = vector.broadcast %c15_i32 : i32 to vector<32x128xi32>
    %48 = arith.cmpi eq, %42, %47 : vector<32x128xi32>
    %cst_24 = arith.constant 0.000000e+00 : f32
    %49 = vector.broadcast %cst_24 : f32 to vector<32x128xf32>
    %50 = arith.select %48, %49, %25 : vector<32x128xi1>, vector<32x128xf32>
    %51 = arith.addf %17, %46 : vector<32x128xf32>
    %52 = arith.addf %51, %50 : vector<32x128xf32>
    %c0_25 = arith.constant 0 : index
    %c0_26 = arith.constant 0 : index
    %53 = vector.load %arg6[%c0_25, %c0_26] : memref<1x128xf32, #tpu.memory_space<vmem>>, vector<1x128xf32>
    %54 = vector.broadcast %53 : vector<1x128xf32> to vector<32x128xf32>
    %55 = arith.mulf %52, %54 : vector<32x128xf32>
    %c0_27 = arith.constant 0 : index
    %c0_28 = arith.constant 0 : index
    %56 = vector.load %arg7[%c0_27, %c0_28] : memref<1x128xf32, #tpu.memory_space<vmem>>, vector<1x128xf32>
    %57 = vector.broadcast %56 : vector<1x128xf32> to vector<32x128xf32>
    %58 = arith.addf %55, %57 : vector<32x128xf32>
    %59 = vector.extract_strided_slice %0 {offsets = [0, 0], sizes = [32, 64], strides = [1, 1]} : vector<32x192xbf16> to vector<32x64xbf16>
    %c0_29 = arith.constant 0 : index
    %c0_30 = arith.constant 0 : index
    %60 = vector.load %arg8[%c0_29, %c0_30] : memref<64x128xbf16, #tpu.memory_space<vmem>>, vector<64x128xbf16>
    %cst_31 = arith.constant dense<0.000000e+00> : vector<32x128xf32>
    %61 = tpu.matmul %59, %60, %cst_31 {dimension_numbers = #tpu.dot_dimension_numbers<[1], [0], [0], [1], [0, 0, 1, 1], [], []>} : vector<32x64xbf16>, vector<64x128xbf16>, vector<32x128xf32> -> vector<32x128xf32>
    %c0_32 = arith.constant 0 : index
    %c0_33 = arith.constant 0 : index
    %62 = vector.load %arg9[%c0_32, %c0_33] : memref<1x128xf32, #tpu.memory_space<vmem>>, vector<1x128xf32>
    %63 = vector.broadcast %62 : vector<1x128xf32> to vector<32x128xf32>
    %64 = arith.mulf %61, %63 : vector<32x128xf32>
    %c0_34 = arith.constant 0 : index
    %c0_35 = arith.constant 0 : index
    %65 = vector.load %arg10[%c0_34, %c0_35] : memref<1x128xf32, #tpu.memory_space<vmem>>, vector<1x128xf32>
    %66 = vector.broadcast %65 : vector<1x128xf32> to vector<32x128xf32>
    %67 = arith.addf %64, %66 : vector<32x128xf32>
    %68 = arith.addf %58, %67 : vector<32x128xf32>
    %cst_36 = arith.constant 0.000000e+00 : f32
    %69 = vector.broadcast %cst_36 : f32 to vector<32x128xf32>
    %70 = arith.maximumf %68, %69 : vector<32x128xf32>
    %c0_37 = arith.constant 0 : index
    %c0_38 = arith.constant 0 : index
    %71 = vector.load %arg11[%c0_37, %c0_38] : memref<32x128xf32, #tpu.memory_space<vmem>>, vector<32x128xf32>
    tpu.vector_store %arg11[%c0_37, %c0_38], %70 {strides = array<i32>} : memref<32x128xf32, #tpu.memory_space<vmem>>, vector<32x128xf32>,
    return
  }
  func.func @transform_0(%arg0: i32) -> (i32, i32) {
    %c0_i32 = arith.constant 0 : i32
    %c0_i32_0 = arith.constant 0 : i32
    return %arg0, %c0_i32 : i32, i32
  }
  func.func @transform_1(%arg0: i32) -> (i32, i32) {
    %c0_i32 = arith.constant 0 : i32
    %c0_i32_0 = arith.constant 0 : i32
    %c0_i32_1 = arith.constant 0 : i32
    return %c0_i32, %c0_i32_0 : i32, i32
  }
  func.func @transform_2(%arg0: i32) -> (i32, i32) {
    %c0_i32 = arith.constant 0 : i32
    %c0_i32_0 = arith.constant 0 : i32
    %c0_i32_1 = arith.constant 0 : i32
    return %c0_i32, %c0_i32_0 : i32, i32
  }
  func.func @transform_3(%arg0: i32) -> (i32, i32) {
    %c0_i32 = arith.constant 0 : i32
    %c0_i32_0 = arith.constant 0 : i32
    %c0_i32_1 = arith.constant 0 : i32
    return %c0_i32, %c0_i32_0 : i32, i32
  }
  func.func @transform_4(%arg0: i32) -> (i32, i32, i32) {
    %c0_i32 = arith.constant 0 : i32
    %c0_i32_0 = arith.constant 0 : i32
    %c0_i32_1 = arith.constant 0 : i32
    %c0_i32_2 = arith.constant 0 : i32
    return %c0_i32, %c0_i32_0, %c0_i32_1 : i32, i32, i32
  }
  func.func @transform_5(%arg0: i32) -> (i32, i32) {
    %c0_i32 = arith.constant 0 : i32
    %c0_i32_0 = arith.constant 0 : i32
    %c0_i32_1 = arith.constant 0 : i32
    return %c0_i32, %c0_i32_0 : i32, i32
  }
  func.func @transform_6(%arg0: i32) -> (i32, i32) {
    %c0_i32 = arith.constant 0 : i32
    %c0_i32_0 = arith.constant 0 : i32
    %c0_i32_1 = arith.constant 0 : i32
    return %c0_i32, %c0_i32_0 : i32, i32
  }
  func.func @transform_7(%arg0: i32) -> (i32, i32) {
    %c0_i32 = arith.constant 0 : i32
    %c0_i32_0 = arith.constant 0 : i32
    %c0_i32_1 = arith.constant 0 : i32
    return %c0_i32, %c0_i32_0 : i32, i32
  }
  func.func @transform_8(%arg0: i32) -> (i32, i32) {
    %c0_i32 = arith.constant 0 : i32
    %c0_i32_0 = arith.constant 0 : i32
    %c0_i32_1 = arith.constant 0 : i32
    return %c0_i32, %c0_i32_0 : i32, i32
  }
  func.func @transform_9(%arg0: i32) -> (i32, i32) {
    %c0_i32 = arith.constant 0 : i32
    %c0_i32_0 = arith.constant 0 : i32
    %c0_i32_1 = arith.constant 0 : i32
    return %c0_i32, %c0_i32_0 : i32, i32
  }
  func.func @transform_10(%arg0: i32) -> (i32, i32) {
    %c0_i32 = arith.constant 0 : i32
    %c0_i32_0 = arith.constant 0 : i32
    return %arg0, %c0_i32 : i32, i32
  }
}

</mosaic_0001>

<llo_original>
// kernel: basic_block_forward.1
$region0: #{basic_block_forward.1}
  #allocation0 [shape = 'u32[]', space=smem, size = 0x4, offset = 0x4, fixed_abs, tag = 'smem constant byte address 0x4 - core index']
  #allocation1 [shape = 'u32[144,128]{1,0:T(1,128)}', space=vmem, size = 0x12000, scoped, tag = 'internal scratch']
  %s0 = inlined_call_operand.vmem [shape: bf16[32,192], index: 0, kind: input, shape index: {}]
  %s1 = inlined_call_operand.vmem [shape: bf16[192,128], index: 1, kind: input, shape index: {}]
  %s2 = inlined_call_operand.vmem [shape: f32[1,128], index: 2, kind: input, shape index: {}]
  %s3 = inlined_call_operand.vmem [shape: f32[1,128], index: 3, kind: input, shape index: {}]
  %s4 = inlined_call_operand.vmem [shape: bf16[3,128,128], index: 4, kind: input, shape index: {}]
  %s5 = inlined_call_operand.vmem [shape: f32[1,128], index: 5, kind: input, shape index: {}]
  %s6 = inlined_call_operand.vmem [shape: f32[1,128], index: 6, kind: input, shape index: {}]
  %s7 = inlined_call_operand.vmem [shape: bf16[64,128], index: 7, kind: input, shape index: {}]
  %s8 = inlined_call_operand.vmem [shape: f32[1,128], index: 8, kind: input, shape index: {}]
  %s9 = inlined_call_operand.vmem [shape: f32[1,128], index: 9, kind: input, shape index: {}]
  %s10 = inlined_call_operand.vmem [shape: f32[32,128], index: 10, kind: output, shape index: {}]
  %s11 = sld [smem:[#allocation0]]
  $region50: #{basic_block_forward.1} parent=0
    _
  %s13 = ssub.s32 1, %s11
  %s14 = scalar_select 0, %s13, %s11
  // Predicated region
  $region2: #{basic_block_forward.1} parent=0 // pred_check
    _
  $region3: #{basic_block_forward.1} parent=0 // pred_check_branch
    %16 = sbr.rel (0) target = $region5
  $region4: #{basic_block_forward.1} parent=0 // pred_region
    _
  $region5: #{basic_block_forward.1} parent=0 // pred_fallthru
    _
  // Predicated region
  $region6: #{basic_block_forward.1} parent=0 // pred_check
    _
  $region7: #{basic_block_forward.1} parent=0 // pred_check_branch
    %18 = sbr.rel (0) target = $region9
  $region8: #{basic_block_forward.1} parent=0 // pred_region
    _
  $region9: #{basic_block_forward.1} parent=0 // pred_fallthru
    _
  // Predicated region
  $region10: #{basic_block_forward.1} parent=0 // pred_check
    _
  $region11: #{basic_block_forward.1} parent=0 // pred_check_branch
    %20 = sbr.rel (0) target = $region13
  $region12: #{basic_block_forward.1} parent=0 // pred_region
    _
  $region13: #{basic_block_forward.1} parent=0 // pred_fallthru
    _
  // Predicated region
  $region14: #{basic_block_forward.1} parent=0 // pred_check
    _
  $region15: #{basic_block_forward.1} parent=0 // pred_check_branch
    %22 = sbr.rel (0) target = $region17
  $region16: #{basic_block_forward.1} parent=0 // pred_region
    _
  $region17: #{basic_block_forward.1} parent=0 // pred_fallthru
    _
  // Predicated region
  $region18: #{basic_block_forward.1} parent=0 // pred_check
    _
  $region19: #{basic_block_forward.1} parent=0 // pred_check_branch
    %24 = sbr.rel (0) target = $region21
  $region20: #{basic_block_forward.1} parent=0 // pred_region
    _
  $region21: #{basic_block_forward.1} parent=0 // pred_fallthru
    _
  // Predicated region
  $region22: #{basic_block_forward.1} parent=0 // pred_check
    _
  $region23: #{basic_block_forward.1} parent=0 // pred_check_branch
    %26 = sbr.rel (0) target = $region25
  $region24: #{basic_block_forward.1} parent=0 // pred_region
    _
  $region25: #{basic_block_forward.1} parent=0 // pred_fallthru
    _
  // Predicated region
  $region26: #{basic_block_forward.1} parent=0 // pred_check
    _
  $region27: #{basic_block_forward.1} parent=0 // pred_check_branch
    %28 = sbr.rel (0) target = $region29
  $region28: #{basic_block_forward.1} parent=0 // pred_region
    _
  $region29: #{basic_block_forward.1} parent=0 // pred_fallthru
    _
  // Predicated region
  $region30: #{basic_block_forward.1} parent=0 // pred_check
    _
  $region31: #{basic_block_forward.1} parent=0 // pred_check_branch
    %30 = sbr.rel (0) target = $region33
  $region32: #{basic_block_forward.1} parent=0 // pred_region
    _
  $region33: #{basic_block_forward.1} parent=0 // pred_fallthru
    _
  // Predicated region
  $region34: #{basic_block_forward.1} parent=0 // pred_check
    _
  $region35: #{basic_block_forward.1} parent=0 // pred_check_branch
    %32 = sbr.rel (0) target = $region37
  $region36: #{basic_block_forward.1} parent=0 // pred_region
    _
  $region37: #{basic_block_forward.1} parent=0 // pred_fallthru
    _
  // Predicated region
  $region38: #{basic_block_forward.1} parent=0 // pred_check
    _
  $region39: #{basic_block_forward.1} parent=0 // pred_check_branch
    %34 = sbr.rel (0) target = $region41
  $region40: #{basic_block_forward.1} parent=0 // pred_region
    _
  $region41: #{basic_block_forward.1} parent=0 // pred_fallthru
    _
  %v36 = vld [vmem:[%s0] sm:$0xff]
  %v37 = vld [vmem:[%s0 + $0x8] sm:$0xff]
  %v38 = vld [vmem:[%s0 + $0x10] sm:$0xff]
  %v39 = vld [vmem:[%s0 + $0x18] sm:$0xff]
  %v40 = vld [vmem:[%s1] sm:$0xf]
  %v41 = vld [vmem:[%s1 + $0x4] sm:$0xf]
  %v42 = vld [vmem:[%s1 + $0x8] sm:$0xf]
  %v43 = vld [vmem:[%s1 + $0xc] sm:$0xf]
  %v44 = vld [vmem:[%s1 + $0x10] sm:$0xf]
  %v45 = vld [vmem:[%s1 + $0x14] sm:$0xf]
  %v46 = vld [vmem:[%s1 + $0x18] sm:$0xf]
  %v47 = vld [vmem:[%s1 + $0x1c] sm:$0xf]
  %v48 = vld [vmem:[%s1 + $0x20] sm:$0xf]
  %v49 = vld [vmem:[%s1 + $0x24] sm:$0xf]
  %v50 = vld [vmem:[%s1 + $0x28] sm:$0xf]
  %v51 = vld [vmem:[%s1 + $0x2c] sm:$0xf]
  %v52 = vld [vmem:[%s1 + $0x30] sm:$0xf]
  %v53 = vld [vmem:[%s1 + $0x34] sm:$0xf]
  %v54 = vld [vmem:[%s1 + $0x38] sm:$0xf]
  %v55 = vld [vmem:[%s1 + $0x3c] sm:$0xf]
  %v56 = vld [vmem:[%s1 + $0x40] sm:$0xf]
  %v57 = vld [vmem:[%s1 + $0x44] sm:$0xf]
  %v58 = vld [vmem:[%s1 + $0x48] sm:$0xf]
  %v59 = vld [vmem:[%s1 + $0x4c] sm:$0xf]
  %v60 = vld [vmem:[%s1 + $0x50] sm:$0xf]
  %v61 = vld [vmem:[%s1 + $0x54] sm:$0xf]
  %v62 = vld [vmem:[%s1 + $0x58] sm:$0xf]
  %v63 = vld [vmem:[%s1 + $0x5c] sm:$0xf]
  %v68 = vunpack.c.l.b16 %v36
  %v69 = vunpack.c.h.b16 %v36
  %v70 = vunpack.c.l.b16 %v37
  %v71 = vunpack.c.h.b16 %v37
  %v72 = vunpack.c.l.b16 %v38
  %v73 = vunpack.c.h.b16 %v38
  %v74 = vunpack.c.l.b16 %v39
  %v75 = vunpack.c.h.b16 %v39
  %v76 = vpack.c.b16 %v70, %v68
  %v77 = vpack.c.b16 %v71, %v69
  %v78 = vpack.c.b16 %v74, %v72
  %v79 = vpack.c.b16 %v75, %v73
  %v106 = vunpack.c.l.b16 %v40
  %v107 = vunpack.c.l.b16 %v41
  %v108 = vunpack.c.l.b16 %v42
  %v109 = vunpack.c.l.b16 %v43
  %v110 = vunpack.c.l.b16 %v44
  %v111 = vunpack.c.l.b16 %v45
  %v112 = vunpack.c.l.b16 %v46
  %v113 = vunpack.c.l.b16 %v47
  %v114 = vunpack.c.l.b16 %v48
  %v115 = vunpack.c.l.b16 %v49
  %v116 = vunpack.c.l.b16 %v50
  %v117 = vunpack.c.l.b16 %v51
  %v118 = vunpack.c.l.b16 %v52
  %v119 = vunpack.c.l.b16 %v53
  %v120 = vunpack.c.l.b16 %v54
  %v121 = vunpack.c.l.b16 %v55
  %v122 = vunpack.c.l.b16 %v56
  %v123 = vunpack.c.l.b16 %v57
  %v124 = vunpack.c.l.b16 %v58
  %v125 = vunpack.c.l.b16 %v59
  %v126 = vunpack.c.l.b16 %v60
  %v127 = vunpack.c.l.b16 %v61
  %v128 = vunpack.c.l.b16 %v62
  %v129 = vunpack.c.l.b16 %v63
  %v130 = vpack.c.b16 %v107, %v106
  %v131 = vpack.c.b16 %v109, %v108
  %v132 = vpack.c.b16 %v111, %v110
  %v133 = vpack.c.b16 %v113, %v112
  %v134 = vpack.c.b16 %v115, %v114
  %v135 = vpack.c.b16 %v117, %v116
  %v136 = vpack.c.b16 %v119, %v118
  %v137 = vpack.c.b16 %v121, %v120
  %v138 = vpack.c.b16 %v123, %v122
  %v139 = vpack.c.b16 %v125, %v124
  %v140 = vpack.c.b16 %v127, %v126
  %v141 = vpack.c.b16 %v129, %v128
  %vm154 = vcmask 523264
  %v156 = vsel %vm154, %v77, 0
  %v159 = vsel %vm154, %v79, 0
  %161 = vmatprep.subr.bf16.mxu0 0
  %162 = vmatpush1.bf16.msra.mxu0 %v137
  %163 = vmatprep.subr.bf16.mxu0 0
  %164 = vmatpush1.bf16.msra.mxu0 %v136
  %165 = vmatprep.subr.bf16.mxu0 0
  %166 = vmatpush1.bf16.msra.mxu0 %v135
  %167 = vmatprep.subr.bf16.mxu0 0
  %168 = vmatpush1.bf16.msra.mxu0 %v134
  %169 = vmatprep.subr.bf16.mxu0 0
  %170 = vmatpush1.bf16.msra.mxu0 %v133
  %171 = vmatprep.subr.bf16.mxu0 0
  %172 = vmatpush1.bf16.msra.mxu0 %v132
  %173 = vmatprep.subr.bf16.mxu0 0
  %174 = vmatpush1.bf16.msra.mxu0 %v131
  %175 = vmatprep.subr.bf16.mxu0 0
  %176 = vmatpush1.bf16.msra.mxu0 %v130
  %177 = vmatprep.subr.bf16.mxu0 0
  %178 = vmatpush2.bf16.msra.mxu0 0
  %179 = vmatprep.subr.bf16.mxu0 0
  %180 = vmatpush2.bf16.msra.mxu0 0
  %181 = vmatprep.subr.bf16.mxu0 0
  %182 = vmatpush2.bf16.msra.mxu0 0
  %183 = vmatprep.subr.bf16.mxu0 0
  %184 = vmatpush2.bf16.msra.mxu0 0
  %185 = vmatprep.subr.bf16.mxu0 0
  %186 = vmatpush2.bf16.msra.mxu0 %v141
  %187 = vmatprep.subr.bf16.mxu0 0
  %188 = vmatpush2.bf16.msra.mxu0 %v140
  %189 = vmatprep.subr.bf16.mxu0 0
  %190 = vmatpush2.bf16.msra.mxu0 %v139
  %191 = vmatprep.subr.bf16.mxu0 0
  %192 = vmatpush2.bf16.msra.mxu0 %v138
  %193 = vmatprep.mubr.bf16.mxu0 %v156
  %194 = vmatmul.mubr.bf16.gmra.mxu0 %v76
  %v195 = vpop.f32.mrf.mxu0
  %v196 = vadd.f32 0.0, %v195
  %v197 = vpop.f32.mrf.mxu0
  %v198 = vpop.f32.mrf.mxu0
  %v199 = vadd.f32 0.0, %v198
  %v200 = vpop.f32.mrf.mxu0
  %201 = vmatprep.mubr.bf16.mxu0 %v159
  %202 = vmatmul.mubr.bf16.gmra.mxu0 %v78
  %v203 = vpop.f32.mrf.mxu0
  %v204 = vadd.f32 0.0, %v203
  %v205 = vpop.f32.mrf.mxu0
  %v206 = vpop.f32.mrf.mxu0
  %v207 = vadd.f32 0.0, %v206
  %v208 = vpop.f32.mrf.mxu0
  %209 = vdwg.mxu0
  %v210 = vld [vmem:[%s2] sm:$0x1]
  %v212 = vlaneseq
  %v213 = vshrl.u32 %v212, 7
  %v214 = vsub.s32 0, %v213
  %v215 = vrot.slane %v210, %v214
  %v217 = vmul.f32 %v196, %v215
  %v218 = vmul.f32 %v199, %v215
  %v219 = vmul.f32 %v204, %v215
  %v220 = vmul.f32 %v207, %v215
  %v221 = vld [vmem:[%s3] sm:$0x1]
  %v223 = vlaneseq
  %v224 = vshrl.u32 %v223, 7
  %v225 = vsub.s32 0, %v224
  %v226 = vrot.slane %v221, %v225
  %v228 = vadd.f32 %v217, %v226
  %v229 = vadd.f32 %v218, %v226
  %v230 = vadd.f32 %v219, %v226
  %v231 = vadd.f32 %v220, %v226
  %v232 = vmax.f32 %v228, 0.0
  %v233 = vmax.f32 %v229, 0.0
  %v234 = vmax.f32 %v230, 0.0
  %v235 = vmax.f32 %v231, 0.0
  %v236 = vpack.c.bf16 %v233, %v232
  %v237 = vpack.c.bf16 %v235, %v234
  %v238 = vld [vmem:[%s4] sm:$0xf]
  %v239 = vld [vmem:[%s4 + $0x4] sm:$0xf]
  %v240 = vld [vmem:[%s4 + $0x8] sm:$0xf]
  %v241 = vld [vmem:[%s4 + $0xc] sm:$0xf]
  %v242 = vld [vmem:[%s4 + $0x10] sm:$0xf]
  %v243 = vld [vmem:[%s4 + $0x14] sm:$0xf]
  %v244 = vld [vmem:[%s4 + $0x18] sm:$0xf]
  %v245 = vld [vmem:[%s4 + $0x1c] sm:$0xf]
  %v246 = vld [vmem:[%s4 + $0x20] sm:$0xf]
  %v247 = vld [vmem:[%s4 + $0x24] sm:$0xf]
  %v248 = vld [vmem:[%s4 + $0x28] sm:$0xf]
  %v249 = vld [vmem:[%s4 + $0x2c] sm:$0xf]
  %v250 = vld [vmem:[%s4 + $0x30] sm:$0xf]
  %v251 = vld [vmem:[%s4 + $0x34] sm:$0xf]
  %v252 = vld [vmem:[%s4 + $0x38] sm:$0xf]
  %v253 = vld [vmem:[%s4 + $0x3c] sm:$0xf]
  %v270 = vunpack.c.l.b16 %v238
  %v271 = vunpack.c.l.b16 %v239
  %v272 = vunpack.c.l.b16 %v240
  %v273 = vunpack.c.l.b16 %v241
  %v274 = vunpack.c.l.b16 %v242
  %v275 = vunpack.c.l.b16 %v243
  %v276 = vunpack.c.l.b16 %v244
  %v277 = vunpack.c.l.b16 %v245
  %v278 = vunpack.c.l.b16 %v246
  %v279 = vunpack.c.l.b16 %v247
  %v280 = vunpack.c.l.b16 %v248
  %v281 = vunpack.c.l.b16 %v249
  %v282 = vunpack.c.l.b16 %v250
  %v283 = vunpack.c.l.b16 %v251
  %v284 = vunpack.c.l.b16 %v252
  %v285 = vunpack.c.l.b16 %v253
  %v286 = vpack.c.b16 %v271, %v270
  %v287 = vpack.c.b16 %v273, %v272
  %v288 = vpack.c.b16 %v275, %v274
  %v289 = vpack.c.b16 %v277, %v276
  %v290 = vpack.c.b16 %v279, %v278
  %v291 = vpack.c.b16 %v281, %v280
  %v292 = vpack.c.b16 %v283, %v282
  %v293 = vpack.c.b16 %v285, %v284
  %302 = vmatprep.subr.bf16.mxu0 0
  %303 = vmatpush1.bf16.msra.mxu0 %v293
  %304 = vmatprep.subr.bf16.mxu0 0
  %305 = vmatpush1.bf16.msra.mxu0 %v292
  %306 = vmatprep.subr.bf16.mxu0 0
  %307 = vmatpush1.bf16.msra.mxu0 %v291
  %308 = vmatprep.subr.bf16.mxu0 0
  %309 = vmatpush1.bf16.msra.mxu0 %v290
  %310 = vmatprep.subr.bf16.mxu0 0
  %311 = vmatpush1.bf16.msra.mxu0 %v289
  %312 = vmatprep.subr.bf16.mxu0 0
  %313 = vmatpush1.bf16.msra.mxu0 %v288
  %314 = vmatprep.subr.bf16.mxu0 0
  %315 = vmatpush1.bf16.msra.mxu0 %v287
  %316 = vmatprep.subr.bf16.mxu0 0
  %317 = vmatpush1.bf16.msra.mxu0 %v286
  %318 = vmatprep.subr.bf16.mxu0 0
  %319 = vmatpush2.bf16.msra.mxu0 0
  %320 = vmatprep.subr.bf16.mxu0 0
  %321 = vmatpush2.bf16.msra.mxu0 0
  %322 = vmatprep.subr.bf16.mxu0 0
  %323 = vmatpush2.bf16.msra.mxu0 0
  %324 = vmatprep.subr.bf16.mxu0 0
  %325 = vmatpush2.bf16.msra.mxu0 0
  %326 = vmatprep.subr.bf16.mxu0 0
  %327 = vmatpush2.bf16.msra.mxu0 0
  %328 = vmatprep.subr.bf16.mxu0 0
  %329 = vmatpush2.bf16.msra.mxu0 0
  %330 = vmatprep.subr.bf16.mxu0 0
  %331 = vmatpush2.bf16.msra.mxu0 0
  %332 = vmatprep.subr.bf16.mxu0 0
  %333 = vmatpush2.bf16.msra.mxu0 0
  %334 = vmatprep.mubr.bf16.mxu0 0
  %335 = vmatmul.mubr.bf16.gmra.mxu0 %v236
  %v336 = vpop.f32.mrf.mxu0
  %v337 = vadd.f32 0.0, %v336
  %v338 = vpop.f32.mrf.mxu0
  %v339 = vpop.f32.mrf.mxu0
  %v340 = vadd.f32 0.0, %v339
  %v341 = vpop.f32.mrf.mxu0
  %342 = vmatprep.mubr.bf16.mxu0 0
  %343 = vmatmul.mubr.bf16.gmra.mxu0 %v237
  %v344 = vpop.f32.mrf.mxu0
  %v345 = vadd.f32 0.0, %v344
  %v346 = vpop.f32.mrf.mxu0
  %v347 = vpop.f32.mrf.mxu0
  %v348 = vadd.f32 0.0, %v347
  %v349 = vpop.f32.mrf.mxu0
  %350 = vdwg.mxu0
  %s351 = scalar_lea.vmem %s4, 64
  %v352 = vld [vmem:[%s351] sm:$0xf]
  %v353 = vld [vmem:[%s351 + $0x4] sm:$0xf]
  %v354 = vld [vmem:[%s351 + $0x8] sm:$0xf]
  %v355 = vld [vmem:[%s351 + $0xc] sm:$0xf]
  %v356 = vld [vmem:[%s351 + $0x10] sm:$0xf]
  %v357 = vld [vmem:[%s351 + $0x14] sm:$0xf]
  %v358 = vld [vmem:[%s351 + $0x18] sm:$0xf]
  %v359 = vld [vmem:[%s351 + $0x1c] sm:$0xf]
  %v360 = vld [vmem:[%s351 + $0x20] sm:$0xf]
  %v361 = vld [vmem:[%s351 + $0x24] sm:$0xf]
  %v362 = vld [vmem:[%s351 + $0x28] sm:$0xf]
  %v363 = vld [vmem:[%s351 + $0x2c] sm:$0xf]
  %v364 = vld [vmem:[%s351 + $0x30] sm:$0xf]
  %v365 = vld [vmem:[%s351 + $0x34] sm:$0xf]
  %v366 = vld [vmem:[%s351 + $0x38] sm:$0xf]
  %v367 = vld [vmem:[%s351 + $0x3c] sm:$0xf]
  %s368 = scalar_lea.vmem %s4, 128
  %v369 = vld [vmem:[%s368] sm:$0xf]
  %v370 = vld [vmem:[%s368 + $0x4] sm:$0xf]
  %v371 = vld [vmem:[%s368 + $0x8] sm:$0xf]
  %v372 = vld [vmem:[%s368 + $0xc] sm:$0xf]
  %v373 = vld [vmem:[%s368 + $0x10] sm:$0xf]
  %v374 = vld [vmem:[%s368 + $0x14] sm:$0xf]
  %v375 = vld [vmem:[%s368 + $0x18] sm:$0xf]
  %v376 = vld [vmem:[%s368 + $0x1c] sm:$0xf]
  %v377 = vld [vmem:[%s368 + $0x20] sm:$0xf]
  %v378 = vld [vmem:[%s368 + $0x24] sm:$0xf]
  %v379 = vld [vmem:[%s368 + $0x28] sm:$0xf]
  %v380 = vld [vmem:[%s368 + $0x2c] sm:$0xf]
  %v381 = vld [vmem:[%s368 + $0x30] sm:$0xf]
  %v382 = vld [vmem:[%s368 + $0x34] sm:$0xf]
  %v383 = vld [vmem:[%s368 + $0x38] sm:$0xf]
  %v384 = vld [vmem:[%s368 + $0x3c] sm:$0xf]
  %v401 = vunpack.c.l.b16 %v369
  %v402 = vunpack.c.l.b16 %v370
  %v403 = vunpack.c.l.b16 %v371
  %v404 = vunpack.c.l.b16 %v372
  %v405 = vunpack.c.l.b16 %v373
  %v406 = vunpack.c.l.b16 %v374
  %v407 = vunpack.c.l.b16 %v375
  %v408 = vunpack.c.l.b16 %v376
  %v409 = vunpack.c.l.b16 %v377
  %v410 = vunpack.c.l.b16 %v378
  %v411 = vunpack.c.l.b16 %v379
  %v412 = vunpack.c.l.b16 %v380
  %v413 = vunpack.c.l.b16 %v381
  %v414 = vunpack.c.l.b16 %v382
  %v415 = vunpack.c.l.b16 %v383
  %v416 = vunpack.c.l.b16 %v384
  %v417 = vpack.c.b16 %v402, %v401
  %v418 = vpack.c.b16 %v404, %v403
  %v419 = vpack.c.b16 %v406, %v405
  %v420 = vpack.c.b16 %v408, %v407
  %v421 = vpack.c.b16 %v410, %v409
  %v422 = vpack.c.b16 %v412, %v411
  %v423 = vpack.c.b16 %v414, %v413
  %v424 = vpack.c.b16 %v416, %v415
  %433 = vmatprep.subr.bf16.mxu0 0
  %434 = vmatpush1.bf16.msra.mxu0 %v424
  %435 = vmatprep.subr.bf16.mxu0 0
  %436 = vmatpush1.bf16.msra.mxu0 %v423
  %437 = vmatprep.subr.bf16.mxu0 0
  %438 = vmatpush1.bf16.msra.mxu0 %v422
  %439 = vmatprep.subr.bf16.mxu0 0
  %440 = vmatpush1.bf16.msra.mxu0 %v421
  %441 = vmatprep.subr.bf16.mxu0 0
  %442 = vmatpush1.bf16.msra.mxu0 %v420
  %443 = vmatprep.subr.bf16.mxu0 0
  %444 = vmatpush1.bf16.msra.mxu0 %v419
  %445 = vmatprep.subr.bf16.mxu0 0
  %446 = vmatpush1.bf16.msra.mxu0 %v418
  %447 = vmatprep.subr.bf16.mxu0 0
  %448 = vmatpush1.bf16.msra.mxu0 %v417
  %449 = vmatprep.subr.bf16.mxu0 0
  %450 = vmatpush2.bf16.msra.mxu0 0
  %451 = vmatprep.subr.bf16.mxu0 0
  %452 = vmatpush2.bf16.msra.mxu0 0
  %453 = vmatprep.subr.bf16.mxu0 0
  %454 = vmatpush2.bf16.msra.mxu0 0
  %455 = vmatprep.subr.bf16.mxu0 0
  %456 = vmatpush2.bf16.msra.mxu0 0
  %457 = vmatprep.subr.bf16.mxu0 0
  %458 = vmatpush2.bf16.msra.mxu0 0
  %459 = vmatprep.subr.bf16.mxu0 0
  %460 = vmatpush2.bf16.msra.mxu0 0
  %461 = vmatprep.subr.bf16.mxu0 0
  %462 = vmatpush2.bf16.msra.mxu0 0
  %463 = vmatprep.subr.bf16.mxu0 0
  %464 = vmatpush2.bf16.msra.mxu0 0
  %465 = vmatprep.mubr.bf16.mxu0 0
  %466 = vmatmul.mubr.bf16.gmra.mxu0 %v236
  %v467 = vpop.f32.mrf.mxu0
  %v468 = vadd.f32 0.0, %v467
  %v469 = vpop.f32.mrf.mxu0
  %v470 = vpop.f32.mrf.mxu0
  %v471 = vadd.f32 0.0, %v470
  %v472 = vpop.f32.mrf.mxu0
  %473 = vmatprep.mubr.bf16.mxu0 0
  %474 = vmatmul.mubr.bf16.gmra.mxu0 %v237
  %v475 = vpop.f32.mrf.mxu0
  %v476 = vadd.f32 0.0, %v475
  %v477 = vpop.f32.mrf.mxu0
  %v478 = vpop.f32.mrf.mxu0
  %v479 = vadd.f32 0.0, %v478
  %v480 = vpop.f32.mrf.mxu0
  %481 = vdwg.mxu0
  %vm486 = vcmask 1040384
  %v487 = vrot.slane %v337, 7
  %v488 = vrot.slane %v340, 7
  %v489 = vsel %vm486, %v487, %v488
  %v490 = vrot.slane %v345, 7
  %v491 = vsel %vm486, %v488, %v490
  %v492 = vrot.slane %v348, 7
  %v493 = vsel %vm486, %v490, %v492
  %v498 = vsel %vm486, 0.0, %v487
  %vm503 = vcmask 1046528
  %v504 = vrot.slane %v468, 1
  %v505 = vrot.slane %v471, 1
  %v506 = vsel %vm503, %v504, %v505
  %v507 = vrot.slane %v476, 1
  %v508 = vsel %vm503, %v505, %v507
  %v509 = vrot.slane %v479, 1
  %v510 = vsel %vm503, %v507, %v509
  %v515 = vsel %vm503, %v509, 0.0
  %v516 = vlaneseq
  %v517 = vshrl.u32 %v516, 7
  %v518 = vadd.s32 %v517, 8
  %v519 = vadd.s32 %v517, 16
  %v520 = vadd.s32 %v517, 24
  %vm521 = vcmp.lt.s32.totalorder %v517, 0
  %v522 = vsub.s32 0, %v517
  %v523 = vsel %vm521, %v522, %v517
  %v524 = vshrl.u32 %v523, 4
  %v525 = vand.u32 %v523, 15
  %v526 = vsub.s32 0, %v525
  %v527 = vsel %vm521, %v526, %v525
  %vm528 = vcmp.lt.s32.totalorder %v518, 0
  %v529 = vsub.s32 0, %v518
  %v530 = vsel %vm528, %v529, %v518
  %v531 = vshrl.u32 %v530, 4
  %v532 = vand.u32 %v530, 15
  %v533 = vsub.s32 0, %v532
  %v534 = vsel %vm528, %v533, %v532
  %vm535 = vcmp.lt.s32.totalorder %v519, 0
  %v536 = vsub.s32 0, %v519
  %v537 = vsel %vm535, %v536, %v519
  %v538 = vshrl.u32 %v537, 4
  %v539 = vand.u32 %v537, 15
  %v540 = vsub.s32 0, %v539
  %v541 = vsel %vm535, %v540, %v539
  %vm542 = vcmp.lt.s32.totalorder %v520, 0
  %v543 = vsub.s32 0, %v520
  %v544 = vsel %vm542, %v543, %v520
  %v545 = vshrl.u32 %v544, 4
  %v546 = vand.u32 %v544, 15
  %v547 = vsub.s32 0, %v546
  %v548 = vsel %vm542, %v547, %v546
  %vm549 = vcmp.ne.s32.totalorder %v527, 0
  %vm550 = vcmp.ne.s32.totalorder %v534, 0
  %vm551 = vcmp.ne.s32.totalorder %v541, 0
  %vm552 = vcmp.ne.s32.totalorder %v548, 0
  %vm553 = vcmp.lt.s32.totalorder %v527, 0
  %vm554 = vcmp.lt.s32.totalorder %v534, 0
  %vm555 = vcmp.lt.s32.totalorder %v541, 0
  %vm556 = vcmp.lt.s32.totalorder %v548, 0
  %vm557 = vmand %vm553, %vm549
  %vm558 = vmand %vm554, %vm550
  %vm559 = vmand %vm555, %vm551
  %vm560 = vmand %vm556, %vm552
  %v561 = vadd.s32 %v527, 16
  %v562 = vadd.s32 %v534, 16
  %v563 = vadd.s32 %v541, 16
  %v564 = vadd.s32 %v548, 16
  %v565 = vsel %vm557, %v561, %v527
  %v566 = vsel %vm558, %v562, %v534
  %v567 = vsel %vm559, %v563, %v541
  %v568 = vsel %vm560, %v564, %v548
  %vm569 = vcmp.eq.s32.totalorder %v565, 0
  %vm570 = vcmp.eq.s32.totalorder %v566, 0
  %vm571 = vcmp.eq.s32.totalorder %v567, 0
  %vm572 = vcmp.eq.s32.totalorder %v568, 0
  %v573 = vsel %vm569, 0.0, %v498
  %v574 = vsel %vm570, 0.0, %v489
  %v575 = vsel %vm571, 0.0, %v491
  %v576 = vsel %vm572, 0.0, %v493
  %vm577 = vcmp.eq.s32.totalorder %v565, 15
  %vm578 = vcmp.eq.s32.totalorder %v566, 15
  %vm579 = vcmp.eq.s32.totalorder %v567, 15
  %vm580 = vcmp.eq.s32.totalorder %v568, 15
  %v581 = vsel %vm577, 0.0, %v506
  %v582 = vsel %vm578, 0.0, %v508
  %v583 = vsel %vm579, 0.0, %v510
  %v584 = vsel %vm580, 0.0, %v515
  %v601 = vunpack.c.l.b16 %v352
  %v602 = vunpack.c.l.b16 %v353
  %v603 = vunpack.c.l.b16 %v354
  %v604 = vunpack.c.l.b16 %v355
  %v605 = vunpack.c.l.b16 %v356
  %v606 = vunpack.c.l.b16 %v357
  %v607 = vunpack.c.l.b16 %v358
  %v608 = vunpack.c.l.b16 %v359
  %v609 = vunpack.c.l.b16 %v360
  %v610 = vunpack.c.l.b16 %v361
  %v611 = vunpack.c.l.b16 %v362
  %v612 = vunpack.c.l.b16 %v363
  %v613 = vunpack.c.l.b16 %v364
  %v614 = vunpack.c.l.b16 %v365
  %v615 = vunpack.c.l.b16 %v366
  %v616 = vunpack.c.l.b16 %v367
  %v617 = vpack.c.b16 %v602, %v601
  %v618 = vpack.c.b16 %v604, %v603
  %v619 = vpack.c.b16 %v606, %v605
  %v620 = vpack.c.b16 %v608, %v607
  %v621 = vpack.c.b16 %v610, %v609
  %v622 = vpack.c.b16 %v612, %v611
  %v623 = vpack.c.b16 %v614, %v613
  %v624 = vpack.c.b16 %v616, %v615
  %633 = vmatprep.subr.bf16.mxu0 0
  %634 = vmatpush1.bf16.msra.mxu0 %v624
  %635 = vmatprep.subr.bf16.mxu0 0
  %636 = vmatpush1.bf16.msra.mxu0 %v623
  %637 = vmatprep.subr.bf16.mxu0 0
  %638 = vmatpush1.bf16.msra.mxu0 %v622
  %639 = vmatprep.subr.bf16.mxu0 0
  %640 = vmatpush1.bf16.msra.mxu0 %v621
  %641 = vmatprep.subr.bf16.mxu0 0
  %642 = vmatpush1.bf16.msra.mxu0 %v620
  %643 = vmatprep.subr.bf16.mxu0 0
  %644 = vmatpush1.bf16.msra.mxu0 %v619
  %645 = vmatprep.subr.bf16.mxu0 0
  %646 = vmatpush1.bf16.msra.mxu0 %v618
  %647 = vmatprep.subr.bf16.mxu0 0
  %648 = vmatpush1.bf16.msra.mxu0 %v617
  %649 = vmatprep.subr.bf16.mxu0 0
  %650 = vmatpush2.bf16.msra.mxu0 0
  %651 = vmatprep.subr.bf16.mxu0 0
  %652 = vmatpush2.bf16.msra.mxu0 0
  %653 = vmatprep.subr.bf16.mxu0 0
  %654 = vmatpush2.bf16.msra.mxu0 0
  %655 = vmatprep.subr.bf16.mxu0 0
  %656 = vmatpush2.bf16.msra.mxu0 0
  %657 = vmatprep.subr.bf16.mxu0 0
  %658 = vmatpush2.bf16.msra.mxu0 0
  %659 = vmatprep.subr.bf16.mxu0 0
  %660 = vmatpush2.bf16.msra.mxu0 0
  %661 = vmatprep.subr.bf16.mxu0 0
  %662 = vmatpush2.bf16.msra.mxu0 0
  %663 = vmatprep.subr.bf16.mxu0 0
  %664 = vmatpush2.bf16.msra.mxu0 0
  %665 = vmatprep.mubr.bf16.mxu0 0
  %666 = vmatmul.mubr.bf16.gmra.mxu0 %v236
  %v667 = vpop.f32.mrf.mxu0
  %v668 = vadd.f32 %v573, %v667
  %v669 = vpop.f32.mrf.mxu0
  %v670 = vpop.f32.mrf.mxu0
  %v671 = vadd.f32 %v574, %v670
  %v672 = vpop.f32.mrf.mxu0
  %673 = vmatprep.mubr.bf16.mxu0 0
  %674 = vmatmul.mubr.bf16.gmra.mxu0 %v237
  %v675 = vpop.f32.mrf.mxu0
  %v676 = vadd.f32 %v575, %v675
  %v677 = vpop.f32.mrf.mxu0
  %v678 = vpop.f32.mrf.mxu0
  %v679 = vadd.f32 %v576, %v678
  %v680 = vpop.f32.mrf.mxu0
  %681 = vdwg.mxu0
  %v682 = vadd.f32 %v668, %v581
  %v683 = vadd.f32 %v671, %v582
  %v684 = vadd.f32 %v676, %v583
  %v685 = vadd.f32 %v679, %v584
  %v686 = vld [vmem:[%s5] sm:$0x1]
  %v688 = vlaneseq
  %v689 = vshrl.u32 %v688, 7
  %v690 = vsub.s32 0, %v689
  %v691 = vrot.slane %v686, %v690
  %v693 = vmul.f32 %v682, %v691
  %v694 = vmul.f32 %v683, %v691
  %v695 = vmul.f32 %v684, %v691
  %v696 = vmul.f32 %v685, %v691
  %v697 = vld [vmem:[%s6] sm:$0x1]
  %v699 = vlaneseq
  %v700 = vshrl.u32 %v699, 7
  %v701 = vsub.s32 0, %v700
  %v702 = vrot.slane %v697, %v701
  %v704 = vadd.f32 %v693, %v702
  %v705 = vadd.f32 %v694, %v702
  %v706 = vadd.f32 %v695, %v702
  %v707 = vadd.f32 %v696, %v702
  %v708 = vld [vmem:[%s7] sm:$0xf]
  %v709 = vld [vmem:[%s7 + $0x4] sm:$0xf]
  %v710 = vld [vmem:[%s7 + $0x8] sm:$0xf]
  %v711 = vld [vmem:[%s7 + $0xc] sm:$0xf]
  %v712 = vld [vmem:[%s7 + $0x10] sm:$0xf]
  %v713 = vld [vmem:[%s7 + $0x14] sm:$0xf]
  %v714 = vld [vmem:[%s7 + $0x18] sm:$0xf]
  %v715 = vld [vmem:[%s7 + $0x1c] sm:$0xf]
  %v724 = vunpack.c.l.b16 %v708
  %v725 = vunpack.c.l.b16 %v709
  %v726 = vunpack.c.l.b16 %v710
  %v727 = vunpack.c.l.b16 %v711
  %v728 = vunpack.c.l.b16 %v712
  %v729 = vunpack.c.l.b16 %v713
  %v730 = vunpack.c.l.b16 %v714
  %v731 = vunpack.c.l.b16 %v715
  %v732 = vpack.c.b16 %v725, %v724
  %v733 = vpack.c.b16 %v727, %v726
  %v734 = vpack.c.b16 %v729, %v728
  %v735 = vpack.c.b16 %v731, %v730
  %v741 = vsel %vm154, %v76, 0
  %v744 = vsel %vm154, %v78, 0
  %746 = vmatprep.subr.bf16.mxu0 0
  %747 = vmatpush1.bf16.msra.mxu0 0
  %748 = vmatprep.subr.bf16.mxu0 0
  %749 = vmatpush1.bf16.msra.mxu0 0
  %750 = vmatprep.subr.bf16.mxu0 0
  %751 = vmatpush1.bf16.msra.mxu0 0
  %752 = vmatprep.subr.bf16.mxu0 0
  %753 = vmatpush1.bf16.msra.mxu0 0
  %754 = vmatprep.subr.bf16.mxu0 0
  %755 = vmatpush1.bf16.msra.mxu0 %v735
  %756 = vmatprep.subr.bf16.mxu0 0
  %757 = vmatpush1.bf16.msra.mxu0 %v734
  %758 = vmatprep.subr.bf16.mxu0 0
  %759 = vmatpush1.bf16.msra.mxu0 %v733
  %760 = vmatprep.subr.bf16.mxu0 0
  %761 = vmatpush1.bf16.msra.mxu0 %v732
  %762 = vmatprep.subr.bf16.mxu0 0
  %763 = vmatpush2.bf16.msra.mxu0 0
  %764 = vmatprep.subr.bf16.mxu0 0
  %765 = vmatpush2.bf16.msra.mxu0 0
  %766 = vmatprep.subr.bf16.mxu0 0
  %767 = vmatpush2.bf16.msra.mxu0 0
  %768 = vmatprep.subr.bf16.mxu0 0
  %769 = vmatpush2.bf16.msra.mxu0 0
  %770 = vmatprep.subr.bf16.mxu0 0
  %771 = vmatpush2.bf16.msra.mxu0 0
  %772 = vmatprep.subr.bf16.mxu0 0
  %773 = vmatpush2.bf16.msra.mxu0 0
  %774 = vmatprep.subr.bf16.mxu0 0
  %775 = vmatpush2.bf16.msra.mxu0 0
  %776 = vmatprep.subr.bf16.mxu0 0
  %777 = vmatpush2.bf16.msra.mxu0 0
  %778 = vmatprep.mubr.bf16.mxu0 0
  %779 = vmatmul.mubr.bf16.gmra.mxu0 %v741
  %v780 = vpop.f32.mrf.mxu0
  %v781 = vadd.f32 0.0, %v780
  %v782 = vpop.f32.mrf.mxu0
  %v783 = vpop.f32.mrf.mxu0
  %v784 = vadd.f32 0.0, %v783
  %v785 = vpop.f32.mrf.mxu0
  %786 = vmatprep.mubr.bf16.mxu0 0
  %787 = vmatmul.mubr.bf16.gmra.mxu0 %v744
  %v788 = vpop.f32.mrf.mxu0
  %v789 = vadd.f32 0.0, %v788
  %v790 = vpop.f32.mrf.mxu0
  %v791 = vpop.f32.mrf.mxu0
  %v792 = vadd.f32 0.0, %v791
  %v793 = vpop.f32.mrf.mxu0
  %794 = vdwg.mxu0
  %v795 = vld [vmem:[%s8] sm:$0x1]
  %v797 = vlaneseq
  %v798 = vshrl.u32 %v797, 7
  %v799 = vsub.s32 0, %v798
  %v800 = vrot.slane %v795, %v799
  %v802 = vmul.f32 %v781, %v800
  %v803 = vmul.f32 %v784, %v800
  %v804 = vmul.f32 %v789, %v800
  %v805 = vmul.f32 %v792, %v800
  %v806 = vld [vmem:[%s9] sm:$0x1]
  %v808 = vlaneseq
  %v809 = vshrl.u32 %v808, 7
  %v810 = vsub.s32 0, %v809
  %v811 = vrot.slane %v806, %v810
  %v813 = vadd.f32 %v802, %v811
  %v814 = vadd.f32 %v803, %v811
  %v815 = vadd.f32 %v804, %v811
  %v816 = vadd.f32 %v805, %v811
  %v817 = vadd.f32 %v704, %v813
  %v818 = vadd.f32 %v705, %v814
  %v819 = vadd.f32 %v706, %v815
  %v820 = vadd.f32 %v707, %v816
  %v821 = vmax.f32 %v817, 0.0
  %v822 = vmax.f32 %v818, 0.0
  %v823 = vmax.f32 %v819, 0.0
  %v824 = vmax.f32 %v820, 0.0
  %825 = vst [vmem:[%s10] sm:$0xff] %v821
  %826 = vst [vmem:[%s10 + $0x8] sm:$0xff] %v822
  %827 = vst [vmem:[%s10 + $0x10] sm:$0xff] %v823
  %828 = vst [vmem:[%s10 + $0x18] sm:$0xff] %v824
  // Predicated region
  $region42: #{basic_block_forward.1} parent=0 // pred_check
    _
  $region43: #{basic_block_forward.1} parent=0 // pred_check_branch
    %830 = sbr.rel (0) target = $region45
  $region44: #{basic_block_forward.1} parent=0 // pred_region
    _
  $region45: #{basic_block_forward.1} parent=0 // pred_fallthru
    _
  // Predicated region
  $region46: #{basic_block_forward.1} parent=0 // pred_check
    _
  $region47: #{basic_block_forward.1} parent=0 // pred_check_branch
    %832 = sbr.rel (0) target = $region49
  $region48: #{basic_block_forward.1} parent=0 // pred_region
    _
  $region49: #{basic_block_forward.1} parent=0 // pred_fallthru
    _

</llo_original>
